<compile_context>
chip_gen: v5e
topology: v5e:2x2
jax: 0.10.0
libtpu: 0.0.40
codegen_flags: <defaults>
</compile_context>

<pallas_src>
import jax
import jax.numpy as jnp
from jax.experimental import pallas as pl
from jax.experimental.pallas import tpu as pltpu

G = 10.0
_LANES = 128


def _ode_kernel(x_ref, o_ref):
    """x_ref: (D, R, 128) SoA tile; o_ref: (2, R, 128) tile.

    Row 0 = theta, row 1 = omega, row 2 = L. Each row is a fully lane- and
    sublane-dense (R, 128) slab, so sin / divide run at full VPU width and
    hide under the DMA.
    """
    theta = x_ref[0]
    omega = x_ref[1]
    ell = x_ref[2]
    o_ref[0] = omega.astype(o_ref.dtype)
    # Exact divide (memory-bound kernel -> extra VPU ops are free).
    o_ref[1] = ((-G / ell) * jnp.sin(theta)).astype(o_ref.dtype)


def _ceil_to(x, m):
    return ((x + m - 1) // m) * m


def _row_block(r_total, d, target_block_bytes):
    """Rows (of 128 lanes) per grid block."""
    if r_total <= 8:
        return r_total  # single block equal to the full array dims (legal)
    # Largest block under the byte target, multiple of 8 sublanes.
    r_max = max(8, (target_block_bytes // (d * _LANES * 4)) // 8 * 8)
    # Keep >= 2 grid steps so ("parallel",) can use both v7x TensorCores.
    r_half = max(8, _ceil_to((r_total + 1) // 2, 8))
    return min(r_max, r_half)


def ode_rhs_soa(x_soa, *, target_block_bytes=4 << 20, vmem_limit_bytes=32 << 20):
    """Transpose-free entry point.

    x_soa: (D, R, 128) with rows [theta, omega, L, ...params] and the batch
    packed densely along (R, 128). Returns (2, R, 128) = [d_theta, d_omega];
    parameter derivatives are identically zero and are not written.
    """
    d, r_total, lanes = x_soa.shape
    if lanes != _LANES:
        raise ValueError("last dim of the SoA operand must be 128")
    if d < 3:
        raise ValueError("need at least (theta, omega, L) rows, got D=%d" % d)

    r_blk = _row_block(r_total, d, target_block_bytes)
    grid = (pl.cdiv(r_total, r_blk),)

    return pl.pallas_call(
        _ode_kernel,
        out_shape=jax.ShapeDtypeStruct((2, r_total, _LANES), x_soa.dtype),
        grid=grid,
        in_specs=[pl.BlockSpec((d, r_blk, _LANES), lambda i: (0, i, 0))],
        out_specs=pl.BlockSpec((2, r_blk, _LANES), lambda i: (0, i, 0)),
        compiler_params=pltpu.CompilerParams(
            dimension_semantics=("parallel",),
            vmem_limit_bytes=vmem_limit_bytes,
        ),
    )(x_soa)


def ode_forward(t, input_t, *, target_block_bytes=4 << 20,
                vmem_limit_bytes=32 << 20):
    """Pallas equivalent of ODE.forward(t, input_t). `t` is unused (as in PyTorch)."""
    del t
    B, D = input_t.shape
    if D < 3:
        raise ValueError("input_t must have >= 3 columns (theta, omega, L)")
    dtype = input_t.dtype

    # Pad the batch to a lane multiple only (<=127 rows, fused into the
    # relayout copy below). L = 1.0 in the dead lanes keeps them finite; they
    # are sliced off before returning.
    bp = _ceil_to(B, _LANES)
    x = input_t
    if bp != B:
        x = jnp.pad(x, ((0, bp - B), (0, 0)), constant_values=1.0)

    # Single relayout to the lane+sublane-dense SoA layout the kernel wants.
    x_soa = x.T.reshape(D, bp // _LANES, _LANES)

    d_soa = ode_rhs_soa(x_soa, target_block_bytes=target_block_bytes,
                        vmem_limit_bytes=vmem_limit_bytes)      # (2, R, 128)

    dxdt = d_soa.reshape(2, bp).T[:B].astype(dtype)             # (B, 2)
    # Zero parameter derivatives are supplied here (kernel never writes them).
    return jnp.concatenate([dxdt, jnp.zeros((B, D - 2), dtype)], axis=1)


def ode_forward_ref(t, input_t):
    """Pure-JAX reference for correctness check."""
    del t
    z_t = input_t[:, :2]
    params = input_t[:, 2:]
    L = params[:, 0]
    d0 = z_t[:, 1]
    d1 = -G / L * jnp.sin(z_t[:, 0])
    dxdt = jnp.stack([d0, d1], axis=1)
    return jnp.concatenate([dxdt, jnp.zeros_like(params)], axis=1)


def _make_input(key, B, n_params):
    k1, k2 = jax.random.split(key)
    state = jax.random.normal(k1, (B, 2), dtype=jnp.float32)
    # Pendulum length L > 0 (first param column); extra params arbitrary.
    params = jax.random.uniform(k2, (B, n_params), dtype=jnp.float32,
                                minval=0.5, maxval=2.0)
    return jnp.concatenate([state, params], axis=1)


if __name__ == "__main__":
    key = jax.random.PRNGKey(0)
    t = jnp.float32(0.0)
    fwd = jax.jit(ode_forward)

    cases = [
        (8, 1),      # tiny batch, D=3 -> single full block
        (333, 2),    # ragged batch, D=4 -> lane-padded, single block
        (4096, 2),   # larger batch, D=4 -> gridded (2 parallel steps)
    ]
    keys = jax.random.split(key, len(cases))
    for (B, n_params), k in zip(cases, keys):
        x = _make_input(k, B=B, n_params=n_params)
        out = jax.block_until_ready(fwd(t, x))
        ref = ode_forward_ref(t, x)
        assert out.shape == x.shape, (out.shape, x.shape)
        # Tight tolerance: exact divide in-kernel (no approx reciprocal).
        assert jnp.allclose(out, ref, atol=1e-4, rtol=1e-5), (
            f"mismatch for B={B}, D={2 + n_params}: "
            f"max abs err {jnp.max(jnp.abs(out - ref))}")

    print("KERNEL_OK")
</pallas_src>

<mosaic_0001>
module attributes {stable_mosaic.version = 11 : i64} {
  func.func @_ode_kernel(%arg0: i32, %arg1: memref<3x1x128xf32, #tpu.memory_space<vmem>>, %arg2: memref<2x1x128xf32, #tpu.memory_space<vmem>>) attributes {dimension_semantics = [#tpu.dimension_semantics<parallel>], iteration_bounds = array<i64: 1>, scalar_prefetch = 0 : i64, scratch_operands = 0 : i64, tpu.core_type = #tpu.core_type<tc>, window_params = [{transform_indices = @transform_0, window_bounds = array<i64: 3, 1, 128>}, {transform_indices = @transform_1, window_bounds = array<i64: 2, 1, 128>}]} {
    %c0 = arith.constant 0 : index
    %c0_0 = arith.constant 0 : index
    %c0_1 = arith.constant 0 : index
    %0 = vector.load %arg1[%c0, %c0_0, %c0_1] : memref<3x1x128xf32, #tpu.memory_space<vmem>>, vector<1x1x128xf32>
    %1 = vector.shape_cast %0 : vector<1x1x128xf32> to vector<1x128xf32>
    %c1 = arith.constant 1 : index
    %c0_2 = arith.constant 0 : index
    %c0_3 = arith.constant 0 : index
    %2 = vector.load %arg1[%c1, %c0_2, %c0_3] : memref<3x1x128xf32, #tpu.memory_space<vmem>>, vector<1x1x128xf32>
    %3 = vector.shape_cast %2 : vector<1x1x128xf32> to vector<1x128xf32>
    %c2 = arith.constant 2 : index
    %c0_4 = arith.constant 0 : index
    %c0_5 = arith.constant 0 : index
    %4 = vector.load %arg1[%c2, %c0_4, %c0_5] : memref<3x1x128xf32, #tpu.memory_space<vmem>>, vector<1x1x128xf32>
    %5 = vector.shape_cast %4 : vector<1x1x128xf32> to vector<1x128xf32>
    %c0_6 = arith.constant 0 : index
    %c0_7 = arith.constant 0 : index
    %c0_8 = arith.constant 0 : index
    %6 = vector.load %arg2[%c0_6, %c0_7, %c0_8] : memref<2x1x128xf32, #tpu.memory_space<vmem>>, vector<1x1x128xf32>
    %7 = vector.shape_cast %6 : vector<1x1x128xf32> to vector<1x128xf32>
    %8 = vector.shape_cast %3 : vector<1x128xf32> to vector<1x1x128xf32>
    tpu.vector_store %arg2[%c0_6, %c0_7, %c0_8], %8 {strides = array<i32>} : memref<2x1x128xf32, #tpu.memory_space<vmem>>, vector<1x1x128xf32>,
    %cst = arith.constant -1.000000e+01 : f32
    %9 = vector.broadcast %cst : f32 to vector<1x128xf32>
    %10 = arith.divf %9, %5 : vector<1x128xf32>
    %11 = math.sin %1 : vector<1x128xf32>
    %12 = arith.mulf %10, %11 : vector<1x128xf32>
    %c1_9 = arith.constant 1 : index
    %c0_10 = arith.constant 0 : index
    %c0_11 = arith.constant 0 : index
    %13 = vector.load %arg2[%c1_9, %c0_10, %c0_11] : memref<2x1x128xf32, #tpu.memory_space<vmem>>, vector<1x1x128xf32>
    %14 = vector.shape_cast %13 : vector<1x1x128xf32> to vector<1x128xf32>
    %15 = vector.shape_cast %12 : vector<1x128xf32> to vector<1x1x128xf32>
    tpu.vector_store %arg2[%c1_9, %c0_10, %c0_11], %15 {strides = array<i32>} : memref<2x1x128xf32, #tpu.memory_space<vmem>>, vector<1x1x128xf32>,
    return
  }
  func.func @transform_0(%arg0: i32) -> (i32, i32, i32) {
    %c0_i32 = arith.constant 0 : i32
    %c0_i32_0 = arith.constant 0 : i32
    %c0_i32_1 = arith.constant 0 : i32
    return %c0_i32, %arg0, %c0_i32_0 : i32, i32, i32
  }
  func.func @transform_1(%arg0: i32) -> (i32, i32, i32) {
    %c0_i32 = arith.constant 0 : i32
    %c0_i32_0 = arith.constant 0 : i32
    %c0_i32_1 = arith.constant 0 : i32
    return %c0_i32, %arg0, %c0_i32_0 : i32, i32, i32
  }
}

</mosaic_0001>

<llo_original>
// kernel: ode_forward.1
$region0: #{ode_forward.1}
  #allocation0 [shape = 'u32[]', space=smem, size = 0x4, offset = 0x4, fixed_abs, tag = 'smem constant byte address 0x4 - core index']
  #allocation1 [shape = 'u32[72,128]{1,0:T(1,128)}', space=vmem, size = 0x9000, scoped, tag = 'internal scratch']
  %s0 = inlined_call_operand.vmem [shape: f32[3,1,128], index: 0, kind: input, shape index: {}]
  %s1 = inlined_call_operand.vmem [shape: f32[2,1,128], index: 1, kind: output, shape index: {}]
  %s2 = sld [smem:[#allocation0]]
  $region14: #{ode_forward.1} parent=0
    _
  %s4 = ssub.s32 1, %s2
  %s5 = scalar_select 0, %s4, %s2
  // Predicated region
  $region2: #{ode_forward.1} parent=0 // pred_check
    _
  $region3: #{ode_forward.1} parent=0 // pred_check_branch
    %7 = sbr.rel (0) target = $region5
  $region4: #{ode_forward.1} parent=0 // pred_region
    _
  $region5: #{ode_forward.1} parent=0 // pred_fallthru
    _
  %v8 = vld [vmem:[%s0] sm:$0x1]
  %s9 = scalar_lea.vmem %s0, 1
  %v10 = vld [vmem:[%s9] sm:$0x1]
  %s11 = scalar_lea.vmem %s0, 2
  %v12 = vld [vmem:[%s11] sm:$0x1]
  %13 = vst [vmem:[%s1] sm:$0x1] %v10
  %v14 = vrcp.pop %v12
  %v15 = vmul.f32 %v12, %v14
  %v16 = vsub.f32 1.0, %v15
  %v17 = vmul.f32 %v14, %v16
  %v18 = vadd.f32 %v14, %v17
  %vm19 = vweird.f32 %v12
  %vm20 = vweird.f32 %v14
  %vm21 = vmor %vm19, %vm20
  %v22 = vsel %vm21, %v14, %v18
  %v23 = vand.u32 2147483647, %v12
  %vm24 = vcmp.eq.f32.partialorder %v23, 8.507059e+37
  %v25 = vand.u32 %v12, 2147483648
  %v26 = vor.u32 1.1754944e-38, %v25
  %v27 = vsel %vm24, %v26, %v22
  %v28 = vmul.f32 -10.0, %v27
  %v29 = vand.u32 2147483647, %v8
  %vm30 = vcmp.le.f32.partialorder %v29, 0.7853982
  %vm31 = vcmp.lt.s32.totalorder %v8, 0
  %v32 = vand.u32 %v8, 2139095040
  %v33 = vshrl.u32 %v32, 23
  %v34 = vsub.s32 %v33, 127
  %v35 = vand.u32 2147483647, %v8
  %v36 = vand.u32 %v35, 8388607
  %v37 = vor.u32 %v36, 8388608
  %v38 = vsub.s32 0, %v37
  %v39 = vadd.s32 %v34, 1
  %vm40 = vcmp.gt.s32.totalorder %v39, 0
  %v41 = vsel %vm40, %v39, 0
  %v42 = vshrl.u32 %v41, 5
  %v43 = vand.u32 %v41, 31
  %v44 = vsub.s32 32, %v43
  %v45 = vshrl.u32 683565275, %v44
  %v46 = vshll.u32 683565275, %v43
  %v47 = vshrl.u32 2475754826, %v44
  %v48 = vor.u32 %v46, %v47
  %v49 = vshll.u32 2475754826, %v43
  %v50 = vshrl.u32 2131351028, %v44
  %v51 = vor.u32 %v49, %v50
  %v52 = vshll.u32 2131351028, %v43
  %v53 = vshrl.u32 2102212464, %v44
  %v54 = vor.u32 %v52, %v53
  %v55 = vshll.u32 2102212464, %v43
  %v56 = vshrl.u32 920167782, %v44
  %v57 = vor.u32 %v55, %v56
  %v58 = vshll.u32 920167782, %v43
  %v59 = vshrl.u32 1326507024, %v44
  %v60 = vor.u32 %v58, %v59
  %vm61 = vcmp.lt.s32.totalorder %v42, 1
  %vm62 = vcmp.lt.s32.totalorder %v42, 2
  %vm63 = vcmp.lt.s32.totalorder %v42, 3
  %vm64 = vcmp.lt.s32.totalorder %v42, 4
  %v65 = vsel %vm61, %v45, %v48
  %v66 = vsel %vm64, %v54, 2102212464
  %v67 = vsel %vm63, %v51, %v66
  %v68 = vsel %vm62, %v65, %v67
  %v69 = vsel %vm61, %v48, %v51
  %v70 = vsel %vm64, %v57, 920167782
  %v71 = vsel %vm63, %v54, %v70
  %v72 = vsel %vm62, %v69, %v71
  %v73 = vsel %vm61, %v51, %v54
  %v74 = vsel %vm64, %v60, 1326507024
  %v75 = vsel %vm63, %v57, %v74
  %v76 = vsel %vm62, %v73, %v75
  %v77 = vshll.u32 %v37, 8
  %v78 = vand.u32 %v77, 65535
  %v79 = vshrl.u32 %v77, 16
  %v80 = vand.u32 %v76, 65535
  %v81 = vshrl.u32 %v76, 16
  %v82 = vmul.u32 %v78, %v80
  %v83 = vmul.u32 %v78, %v81
  %v84 = vmul.u32 %v79, %v80
  %v85 = vmul.u32 %v79, %v81
  %v86 = vshll.u32 %v83, 16
  %v87 = vshrl.u32 %v83, 16
  %v88 = vshll.u32 %v84, 16
  %v89 = vshrl.u32 %v84, 16
  %vm90 = vc.u32 %v82, %v86
  %v91 = vsel %vm90, 1, 0
  %v92 = vadd.s32 %v82, %v86
  %v93 = vadd.s32 %v85, %v91
  %vm94 = vc.u32 %v92, %v88
  %v95 = vsel %vm94, 1, 0
  %v96 = vadd.s32 %v92, %v88
  %v97 = vadd.s32 %v93, %v95
  %v98 = vadd.s32 %v97, %v87
  %v99 = vadd.s32 %v98, %v89
  %v100 = vand.u32 %v77, 65535
  %v101 = vshrl.u32 %v77, 16
  %v102 = vand.u32 %v72, 65535
  %v103 = vshrl.u32 %v72, 16
  %v104 = vmul.u32 %v100, %v102
  %v105 = vmul.u32 %v100, %v103
  %v106 = vmul.u32 %v101, %v102
  %v107 = vmul.u32 %v101, %v103
  %v108 = vshll.u32 %v105, 16
  %v109 = vshrl.u32 %v105, 16
  %v110 = vshll.u32 %v106, 16
  %v111 = vshrl.u32 %v106, 16
  %vm112 = vc.u32 %v104, %v108
  %v113 = vsel %vm112, 1, 0
  %v114 = vadd.s32 %v104, %v108
  %v115 = vadd.s32 %v107, %v113
  %vm116 = vc.u32 %v114, %v110
  %v117 = vsel %vm116, 1, 0
  %v118 = vadd.s32 %v114, %v110
  %v119 = vadd.s32 %v115, %v117
  %v120 = vadd.s32 %v119, %v109
  %v121 = vadd.s32 %v120, %v111
  %v122 = vmul.u32 %v77, %v68
  %v123 = vadd.s32 %v99, %v118
  %vm124 = vc.u32 %v99, %v118
  %v125 = vadd.s32 %v121, 1
  %v126 = vsel %vm124, %v125, %v121
  %v127 = vadd.s32 %v122, %v126
  %v128 = vadd.s32 %v127, 536870912
  %v129 = vshrl.u32 %v128, 30
  %v130 = vshll.u32 %v129, 30
  %v131 = vsub.s32 %v127, %v130
  %vm132 = vcmp.lt.s32.totalorder %v131, 0
  %v133 = vsub.s32 0, %v131
  %v134 = vsel %vm132, %v133, %v131
  %v135 = vclz %v134
  %v136 = vsub.s32 %v135, 2
  %vm137 = vcmp.gt.s32.totalorder 0, %v136
  %v138 = vsel %vm137, 0, %v136
  %v139 = vsub.s32 32, %v138
  %v140 = vshll.u32 %v131, %v138
  %v141 = vshrl.u32 %v123, %v139
  %v142 = vor.u32 %v140, %v141
  %v143 = vsub.s32 4294967266, %v138
  %v144 = vadd.s32 %v143, 127
  %v145 = vshll.u32 %v144, 23
  %v146 = vor.u32 4788187, %v145
  %v147 = vand.u32 2147483647, %v146
  %v149 = vcvt.s32.f32 %v142
  %v150 = vmul.f32 %v149, %v147
  %v151 = vxor.u32 %v150, 2147483648
  %v152 = vsel %vm31, %v151, %v150
  %v153 = vsub.s32 4, %v129
  %v154 = vsel %vm31, %v153, %v129
  %v155 = vsel %vm30, %v8, %v152
  %v156 = vsel %vm30, 0, %v154
  %v157 = vmul.f32 %v155, %v155
  %v158 = vmul.f32 %v157, -0.001358992
  %v159 = vadd.f32 %v158, 0.041655596
  %v160 = vmul.f32 %v157, %v159
  %v161 = vadd.f32 %v160, -0.4999988
  %v162 = vmul.f32 %v157, %v161
  %v163 = vadd.f32 1.0, %v162
  %v164 = vmul.f32 %v155, %v155
  %v165 = vmul.f32 %v164, -0.00019511016
  %v166 = vadd.f32 %v165, 0.008332121
  %v167 = vmul.f32 %v164, %v166
  %v168 = vadd.f32 %v167, -0.16666654
  %v169 = vmul.f32 %v164, %v168
  %v170 = vadd.f32 %v169, 1.0
  %v171 = vmul.f32 %v170, %v155
  %vm172 = vweird.f32 %v8
  %v173 = vadd.s32 %v156, 3
  %v174 = vand.u32 %v173, 3
  %vm175 = vcmp.lt.s32.totalorder %v174, 2
  %vm176 = vcmp.eq.s32.totalorder %v174, 0
  %v177 = vxor.u32 %v171, 2147483648
  %v178 = vsel %vm176, %v163, %v177
  %vm179 = vcmp.eq.s32.totalorder %v174, 2
  %v180 = vxor.u32 %v163, 2147483648
  %v181 = vsel %vm179, %v180, %v171
  %v182 = vsel %vm175, %v178, %v181
  %v183 = vsel %vm172, nan, %v182
  %v184 = vmul.f32 %v28, %v183
  %s185 = scalar_lea.vmem %s1, 1
  %186 = vst [vmem:[%s185] sm:$0x1] %v184
  // Predicated region
  $region6: #{ode_forward.1} parent=0 // pred_check
    _
  $region7: #{ode_forward.1} parent=0 // pred_check_branch
    %188 = sbr.rel (0) target = $region9
  $region8: #{ode_forward.1} parent=0 // pred_region
    _
  $region9: #{ode_forward.1} parent=0 // pred_fallthru
    _
  // Predicated region
  $region10: #{ode_forward.1} parent=0 // pred_check
    _
  $region11: #{ode_forward.1} parent=0 // pred_check_branch
    %190 = sbr.rel (0) target = $region13
  $region12: #{ode_forward.1} parent=0 // pred_region
    _
  $region13: #{ode_forward.1} parent=0 // pred_fallthru
    _

</llo_original>
